<compile_context>
chip_gen: v6e
topology: v6e:2x2x1
jax: 0.10.0
libtpu: 0.0.40
codegen_flags: <defaults>
</compile_context>

<pallas_src>
import numpy as np

import jax
import jax.numpy as jnp
from jax.experimental import pallas as pl
from jax.experimental.pallas import tpu as pltpu


def _round_up(x: int, m: int) -> int:
    return ((x + m - 1) // m) * m


def _ednn_kernel(x_ref, w1_ref, b1_ref, w2_ref, b2_ref, out_ref):
    # x_ref:  (TM, Din)    bf16 VMEM tile (streamed)
    # w1_ref: (Din, H_p)   bf16 VMEM (resident)
    # b1_ref: (1, H_p)     f32  VMEM (resident)
    # w2_ref: (H_p, Dout)  bf16 VMEM (resident)
    # b2_ref: (1, Dout)    f32  VMEM (resident)
    # out_ref:(TM, Dout)   f32  VMEM tile (streamed)
    h = jnp.dot(x_ref[...], w1_ref[...], preferred_element_type=jnp.float32)
    h = jnp.maximum(h + b1_ref[...], 0.0)                    # F.relu(fc1(x)), f32
    # TODO(synk): training-mode F.dropout not implemented (module default is
    # use_dropout=False; in eval mode dropout is the identity anyway).
    o = jnp.dot(h.astype(w2_ref.dtype), w2_ref[...],
                preferred_element_type=jnp.float32)
    out_ref[...] = (o + b2_ref[...]).astype(out_ref.dtype)   # fc2(hidden)


def ednn_prepare_params(w1, b1, w2, b2):
    """One-time parameter prep (call OUTSIDE the hot path).

    w1: (Din, H)  b1: (H,)  w2: (H, Dout)  b2: (Dout,)
    Pads only the hidden axis to a lane-dense multiple of 128 (zero padding is a
    no-op for the math: padded hidden units get zero weight + zero bias,
    relu(0)=0, and feed zero rows of W2), and casts the weight matrices to bf16.
    Biases stay f32.
    """
    w1 = jnp.asarray(w1, jnp.float32)
    b1 = jnp.asarray(b1, jnp.float32)
    w2 = jnp.asarray(w2, jnp.float32)
    b2 = jnp.asarray(b2, jnp.float32)

    Din, H = w1.shape
    Dout = w2.shape[1]
    H_p = _round_up(H, 128)

    w1p = jnp.zeros((Din, H_p), jnp.bfloat16).at[:, :H].set(w1.astype(jnp.bfloat16))
    b1p = jnp.zeros((1, H_p), jnp.float32).at[0, :H].set(b1)
    w2p = jnp.zeros((H_p, Dout), jnp.bfloat16).at[:H, :].set(w2.astype(jnp.bfloat16))
    b2p = jnp.reshape(b2, (1, Dout))
    return (w1p, b1p, w2p, b2p)


def ednn_forward(x, params, *, block_rows: int = 512):
    """Fused EDNN forward.  x: (B, Din) (any float dtype); params from
    ednn_prepare_params.  Returns (B, Dout) float32."""
    w1p, b1p, w2p, b2p = params
    B, Din = x.shape
    assert w1p.shape[0] == Din, (w1p.shape, Din)
    H_p = w1p.shape[1]
    Dout = w2p.shape[1]

    # Halve streamed-x HBM traffic; MXU accumulation stays f32 in the kernel.
    x = jnp.asarray(x, jnp.bfloat16)

    # Batch tile: multiple of 8 (sublane rule), as large as allowed.
    b8 = _round_up(max(B, 1), 8)
    tm = _round_up(min(block_rows, b8), 8)
    # v7x megacore: keep at least 2 (balanced) batch tiles when the batch allows,
    # so the "parallel" grid axis actually feeds both TensorCores.
    if b8 >= 16:
        tm = min(tm, _round_up((b8 + 1) // 2, 8))
    grid = (pl.cdiv(B, tm),)   # non-divisible edges are masked by Pallas

    # VMEM budget from the actual buffers (double-buffered streamed tiles,
    # resident weights/biases, f32 intermediates), with headroom.
    buf_bytes = (
        2 * tm * Din * 2            # x tiles (bf16, double-buffered)
        + 2 * tm * Dout * 4         # out tiles (f32, double-buffered)
        + 2 * (Din * H_p + H_p * Dout) * 2   # resident bf16 weights
        + 2 * (H_p + Dout) * 4      # resident f32 biases
        + tm * (H_p + Dout) * 4     # in-kernel f32 intermediates (h, o)
    )
    vmem_limit = max(min(2 * buf_bytes + (2 << 20), 32 << 20), 16 << 20)

    out = pl.pallas_call(
        _ednn_kernel,
        out_shape=jax.ShapeDtypeStruct((B, Dout), jnp.float32),
        grid_spec=pltpu.PrefetchScalarGridSpec(
            num_scalar_prefetch=0,
            grid=grid,
            in_specs=[
                pl.BlockSpec((tm, Din), lambda i: (i, 0)),     # x tile (streamed)
                pl.BlockSpec((Din, H_p), lambda i: (0, 0)),    # W1 (resident)
                pl.BlockSpec((1, H_p), lambda i: (0, 0)),      # b1 (resident)
                pl.BlockSpec((H_p, Dout), lambda i: (0, 0)),   # W2 (resident)
                pl.BlockSpec((1, Dout), lambda i: (0, 0)),     # b2 (resident)
            ],
            out_specs=pl.BlockSpec((tm, Dout), lambda i: (i, 0)),
        ),
        compiler_params=pltpu.CompilerParams(
            dimension_semantics=("parallel",),   # v7x: batch tiles over 2 TCs
            vmem_limit_bytes=int(vmem_limit),
        ),
        cost_estimate=pl.CostEstimate(
            flops=2 * B * (Din * H_p + H_p * Dout),
            transcendentals=0,
            bytes_accessed=(B * Din * 2 + B * Dout * 4
                            + (Din * H_p + H_p * Dout) * 2
                            + (H_p + Dout) * 4),
        ),
    )(x, w1p, b1p, w2p, b2p)

    return out


def _reference(x, w1, b1, w2, b2):
    x = np.asarray(x, np.float32)
    h = np.maximum(x @ np.asarray(w1, np.float32) + np.asarray(b1, np.float32), 0.0)
    return h @ np.asarray(w2, np.float32) + np.asarray(b2, np.float32)


if __name__ == "__main__":
    key = jax.random.PRNGKey(0)
    k_x, k_w1, k_b1, k_w2, k_b2 = jax.random.split(key, 5)

    # Small shapes consistent with the module: batch=16, in_dim=32, hidden=64, out_dim=16.
    B, Din, H, Dout = 16, 32, 64, 16
    x = jax.random.normal(k_x, (B, Din), dtype=jnp.float32)
    w1 = jax.random.normal(k_w1, (Din, H), dtype=jnp.float32) * 0.1
    b1 = jax.random.normal(k_b1, (H,), dtype=jnp.float32) * 0.1
    w2 = jax.random.normal(k_w2, (H, Dout), dtype=jnp.float32) * 0.1
    b2 = jax.random.normal(k_b2, (Dout,), dtype=jnp.float32) * 0.1

    params = ednn_prepare_params(w1, b1, w2, b2)   # one-time pad + bf16 cast
    out = jax.block_until_ready(ednn_forward(x, params))

    ref = _reference(np.asarray(x), np.asarray(w1), np.asarray(b1),
                     np.asarray(w2), np.asarray(b2))
    assert out.shape == (B, Dout), out.shape
    # bf16 inputs / f32 accumulation: tolerance relaxed vs. the pure-f32 path.
    np.testing.assert_allclose(np.asarray(out), ref, rtol=2e-2, atol=2e-2)
    print("KERNEL_OK")
</pallas_src>

<mosaic_0001>
module attributes {stable_mosaic.version = 11 : i64} {
  func.func @_ednn_kernel(%arg0: i32, %arg1: memref<8x32xbf16, #tpu.memory_space<vmem>>, %arg2: memref<32x128xbf16, #tpu.memory_space<vmem>>, %arg3: memref<1x128xf32, #tpu.memory_space<vmem>>, %arg4: memref<128x16xbf16, #tpu.memory_space<vmem>>, %arg5: memref<1x16xf32, #tpu.memory_space<vmem>>, %arg6: memref<8x16xf32, #tpu.memory_space<vmem>>) attributes {dimension_semantics = [#tpu.dimension_semantics<parallel>], iteration_bounds = array<i64: 2>, scalar_prefetch = 0 : i64, scratch_operands = 0 : i64, tpu.core_type = #tpu.core_type<tc>, window_params = [{transform_indices = @transform_0, window_bounds = array<i64: 8, 32>}, {pipeline_mode = #tpu.pipeline_mode<synchronous>, transform_indices = @transform_1, window_bounds = array<i64: 32, 128>}, {pipeline_mode = #tpu.pipeline_mode<synchronous>, transform_indices = @transform_2, window_bounds = array<i64: 1, 128>}, {pipeline_mode = #tpu.pipeline_mode<synchronous>, transform_indices = @transform_3, window_bounds = array<i64: 128, 16>}, {pipeline_mode = #tpu.pipeline_mode<synchronous>, transform_indices = @transform_4, window_bounds = array<i64: 1, 16>}, {transform_indices = @transform_5, window_bounds = array<i64: 8, 16>}]} {
    %c0 = arith.constant 0 : index
    %c0_0 = arith.constant 0 : index
    %0 = vector.load %arg1[%c0, %c0_0] : memref<8x32xbf16, #tpu.memory_space<vmem>>, vector<8x32xbf16>
    %c0_1 = arith.constant 0 : index
    %c0_2 = arith.constant 0 : index
    %1 = vector.load %arg2[%c0_1, %c0_2] : memref<32x128xbf16, #tpu.memory_space<vmem>>, vector<32x128xbf16>
    %cst = arith.constant dense<0.000000e+00> : vector<8x128xf32>
    %2 = tpu.matmul %0, %1, %cst {dimension_numbers = #tpu.dot_dimension_numbers<[1], [0], [0], [1], [0, 0, 1, 1], [], []>} : vector<8x32xbf16>, vector<32x128xbf16>, vector<8x128xf32> -> vector<8x128xf32>
    %c0_3 = arith.constant 0 : index
    %c0_4 = arith.constant 0 : index
    %3 = vector.load %arg3[%c0_3, %c0_4] : memref<1x128xf32, #tpu.memory_space<vmem>>, vector<1x128xf32>
    %4 = vector.broadcast %3 : vector<1x128xf32> to vector<8x128xf32>
    %5 = arith.addf %2, %4 : vector<8x128xf32>
    %cst_5 = arith.constant 0.000000e+00 : f32
    %6 = vector.broadcast %cst_5 : f32 to vector<8x128xf32>
    %7 = arith.maximumf %5, %6 : vector<8x128xf32>
    %8 = arith.truncf %7 : vector<8x128xf32> to vector<8x128xbf16>
    %c0_6 = arith.constant 0 : index
    %c0_7 = arith.constant 0 : index
    %9 = vector.load %arg4[%c0_6, %c0_7] : memref<128x16xbf16, #tpu.memory_space<vmem>>, vector<128x16xbf16>
    %cst_8 = arith.constant dense<0.000000e+00> : vector<8x16xf32>
    %10 = tpu.matmul %8, %9, %cst_8 {dimension_numbers = #tpu.dot_dimension_numbers<[1], [0], [0], [1], [0, 0, 1, 1], [], []>} : vector<8x128xbf16>, vector<128x16xbf16>, vector<8x16xf32> -> vector<8x16xf32>
    %c0_9 = arith.constant 0 : index
    %c0_10 = arith.constant 0 : index
    %11 = vector.load %arg5[%c0_9, %c0_10] : memref<1x16xf32, #tpu.memory_space<vmem>>, vector<1x16xf32>
    %12 = vector.broadcast %11 : vector<1x16xf32> to vector<8x16xf32>
    %13 = arith.addf %10, %12 : vector<8x16xf32>
    %c0_11 = arith.constant 0 : index
    %c0_12 = arith.constant 0 : index
    %14 = vector.load %arg6[%c0_11, %c0_12] : memref<8x16xf32, #tpu.memory_space<vmem>>, vector<8x16xf32>
    tpu.vector_store %arg6[%c0_11, %c0_12], %13 {strides = array<i32>} : memref<8x16xf32, #tpu.memory_space<vmem>>, vector<8x16xf32>,
    return
  }
  func.func @transform_0(%arg0: i32) -> (i32, i32) {
    %c0_i32 = arith.constant 0 : i32
    %c0_i32_0 = arith.constant 0 : i32
    return %arg0, %c0_i32 : i32, i32
  }
  func.func @transform_1(%arg0: i32) -> (i32, i32) {
    %c0_i32 = arith.constant 0 : i32
    %c0_i32_0 = arith.constant 0 : i32
    %c0_i32_1 = arith.constant 0 : i32
    return %c0_i32, %c0_i32_0 : i32, i32
  }
  func.func @transform_2(%arg0: i32) -> (i32, i32) {
    %c0_i32 = arith.constant 0 : i32
    %c0_i32_0 = arith.constant 0 : i32
    %c0_i32_1 = arith.constant 0 : i32
    return %c0_i32, %c0_i32_0 : i32, i32
  }
  func.func @transform_3(%arg0: i32) -> (i32, i32) {
    %c0_i32 = arith.constant 0 : i32
    %c0_i32_0 = arith.constant 0 : i32
    %c0_i32_1 = arith.constant 0 : i32
    return %c0_i32, %c0_i32_0 : i32, i32
  }
  func.func @transform_4(%arg0: i32) -> (i32, i32) {
    %c0_i32 = arith.constant 0 : i32
    %c0_i32_0 = arith.constant 0 : i32
    %c0_i32_1 = arith.constant 0 : i32
    return %c0_i32, %c0_i32_0 : i32, i32
  }
  func.func @transform_5(%arg0: i32) -> (i32, i32) {
    %c0_i32 = arith.constant 0 : i32
    %c0_i32_0 = arith.constant 0 : i32
    return %arg0, %c0_i32 : i32, i32
  }
}

</mosaic_0001>

<llo_original>
// kernel: tpu_custom_call.1
$region0: #{tpu_custom_call.1}
  #allocation0 [shape = 'u32[]', space=smem, size = 0x4, offset = 0x4, fixed_abs, tag = 'smem constant byte address 0x4 - core index']
  #allocation1 [shape = 'u32[144,128]{1,0:T(1,128)}', space=vmem, size = 0x12000, scoped, tag = 'internal scratch']
  %s0 = inlined_call_operand.vmem [shape: bf16[16,32], index: 0, kind: input, shape index: {}]
  %s1 = inlined_call_operand.vmem [shape: bf16[32,128], index: 1, kind: input, shape index: {}]
  %s2 = inlined_call_operand.vmem [shape: f32[1,128], index: 2, kind: input, shape index: {}]
  %s3 = inlined_call_operand.vmem [shape: bf16[128,16], index: 3, kind: input, shape index: {}]
  %s4 = inlined_call_operand.vmem [shape: f32[1,16], index: 4, kind: input, shape index: {}]
  %s5 = inlined_call_operand.hbm [shape: f32[16,16], index: 5, kind: output, shape index: {}]
  %s6 = sld [smem:[#allocation0]]
  $region53: #{tpu_custom_call.1} parent=0
    _
  %s8 = ssub.s32 1, %s6
  %s9 = scalar_select 0, %s8, %s6
  $region1: #{tpu_custom_call.1} parent=0
    #allocation2 [shape = 'u8[8192]{0}', space=vmem, size = 0x2000, scoped, tag = 'output window, operand 0']
    #allocation3 [shape = 's32[2]{0}', space=sflag, size = 0x8, scoped, tag = 'scoped memory for tpu_custom_call.1']
    %10 = vsyncpa [#allocation3], 0
    %s11 = scalar_lea.sflag [#allocation3], 1
    %12 = vsyncpa %s11, 0
    loop: start=0, step=1, limit=4
    $region2: #{tpu_custom_call.1} parent=1 // loop_pre_header
      _
    $region3: #{tpu_custom_call.1} parent=1 // loop_header
      %s14 = sphi 0, %s18
      %p15 = scmp.ge.s32.totalorder %s14, 4
      %s24 = sphi 0, %s26
      %s27 = sphi 0, %s24
      %s28 = sphi 0, %s27
      %s44 = sphi 0, %s28
      %s48 = sphi 0, %s48
      %s50 = sphi 0, %s48
      %s51 = sphi 0, %s50
      %s65 = sphi 0, %s51
      %s69 = sphi 0, %s69
      %s71 = sphi 0, %s69
      %s72 = sphi 0, %s71
      %s86 = sphi 0, %s72
      %s90 = sphi 0, %s90
      %s92 = sphi 0, %s90
      %s93 = sphi 0, %s92
      %s107 = sphi 0, %s93
      %s111 = sphi 0, %s111
      %s113 = sphi 0, %s111
      %s114 = sphi 0, %s113
      %s128 = sphi 0, %s114
      %s134 = sphi 0, %s136
      %s137 = sphi 0, %s134
      %s138 = sphi 0, %s137
      %s154 = sphi 0, %s138
    $region4: #{tpu_custom_call.1} parent=1 // loop_header_branch
      %17 = sbr.rel (%p15) target = $region8
    $region5: #{tpu_custom_call.1} parent=1 // loop_body
      %s19 = ssub.s32 %s14, 1
      %s20 = ssub.s32 %s14, 2
      %s21 = sadd.s32 %s14, 1
      %s22 = ssub.s32 %s14, %s21
      %p23 = scmp.eq.s32.totalorder %s22, 0
      %s25 = sadd.s32 %s24, 1
      %s26 = scalar_select %p23, %s24, %s25
      %p29 = pneg %p23
      %p30 = scmp.eq.s32.totalorder %s14, 1
      %p31 = por %p29, %p30
      %p32 = scmp.ne.s32.totalorder %s24, %s27
      %p33 = scmp.eq.s32.totalorder %s14, 0
      %p34 = por %p32, %p33
      %p35 = scmp.ne.s32.totalorder %s24, %s27
      %p36 = scmp.eq.s32.totalorder %s19, 1
      %p37 = por %p35, %p36
      %p38 = scmp.ne.s32.totalorder %s27, %s28
      %p39 = scmp.eq.s32.totalorder %s19, 0
      %p40 = por %p38, %p39
      %p41 = scmp.ne.s32.totalorder %s27, %s28
      %p42 = scmp.eq.s32.totalorder %s20, 1
      %p43 = por %p41, %p42
      %p45 = scmp.ne.s32.totalorder %s28, %s44
      %p46 = scmp.eq.s32.totalorder %s20, 0
      %p47 = por %p45, %p46
      %s49 = sadd.s32 %s48, 1
      %p52 = scmp.eq.s32.totalorder %s14, 1
      %p53 = scmp.ne.s32.totalorder %s48, %s50
      %p54 = scmp.eq.s32.totalorder %s14, 0
      %p55 = por %p53, %p54
      %p56 = scmp.ne.s32.totalorder %s48, %s50
      %p57 = scmp.eq.s32.totalorder %s19, 1
      %p58 = por %p56, %p57
      %p59 = scmp.ne.s32.totalorder %s50, %s51
      %p60 = scmp.eq.s32.totalorder %s19, 0
      %p61 = por %p59, %p60
      %p62 = scmp.ne.s32.totalorder %s50, %s51
      %p63 = scmp.eq.s32.totalorder %s20, 1
      %p64 = por %p62, %p63
      %p66 = scmp.ne.s32.totalorder %s51, %s65
      %p67 = scmp.eq.s32.totalorder %s20, 0
      %p68 = por %p66, %p67
      %s70 = sadd.s32 %s69, 1
      %p73 = scmp.eq.s32.totalorder %s14, 1
      %p74 = scmp.ne.s32.totalorder %s69, %s71
      %p75 = scmp.eq.s32.totalorder %s14, 0
      %p76 = por %p74, %p75
      %p77 = scmp.ne.s32.totalorder %s69, %s71
      %p78 = scmp.eq.s32.totalorder %s19, 1
      %p79 = por %p77, %p78
      %p80 = scmp.ne.s32.totalorder %s71, %s72
      %p81 = scmp.eq.s32.totalorder %s19, 0
      %p82 = por %p80, %p81
      %p83 = scmp.ne.s32.totalorder %s71, %s72
      %p84 = scmp.eq.s32.totalorder %s20, 1
      %p85 = por %p83, %p84
      %p87 = scmp.ne.s32.totalorder %s72, %s86
      %p88 = scmp.eq.s32.totalorder %s20, 0
      %p89 = por %p87, %p88
      %s91 = sadd.s32 %s90, 1
      %p94 = scmp.eq.s32.totalorder %s14, 1
      %p95 = scmp.ne.s32.totalorder %s90, %s92
      %p96 = scmp.eq.s32.totalorder %s14, 0
      %p97 = por %p95, %p96
      %p98 = scmp.ne.s32.totalorder %s90, %s92
      %p99 = scmp.eq.s32.totalorder %s19, 1
      %p100 = por %p98, %p99
      %p101 = scmp.ne.s32.totalorder %s92, %s93
      %p102 = scmp.eq.s32.totalorder %s19, 0
      %p103 = por %p101, %p102
      %p104 = scmp.ne.s32.totalorder %s92, %s93
      %p105 = scmp.eq.s32.totalorder %s20, 1
      %p106 = por %p104, %p105
      %p108 = scmp.ne.s32.totalorder %s93, %s107
      %p109 = scmp.eq.s32.totalorder %s20, 0
      %p110 = por %p108, %p109
      %s112 = sadd.s32 %s111, 1
      %p115 = scmp.eq.s32.totalorder %s14, 1
      %p116 = scmp.ne.s32.totalorder %s111, %s113
      %p117 = scmp.eq.s32.totalorder %s14, 0
      %p118 = por %p116, %p117
      %p119 = scmp.ne.s32.totalorder %s111, %s113
      %p120 = scmp.eq.s32.totalorder %s19, 1
      %p121 = por %p119, %p120
      %p122 = scmp.ne.s32.totalorder %s113, %s114
      %p123 = scmp.eq.s32.totalorder %s19, 0
      %p124 = por %p122, %p123
      %p125 = scmp.ne.s32.totalorder %s113, %s114
      %p126 = scmp.eq.s32.totalorder %s20, 1
      %p127 = por %p125, %p126
      %p129 = scmp.ne.s32.totalorder %s114, %s128
      %p130 = scmp.eq.s32.totalorder %s20, 0
      %p131 = por %p129, %p130
      %s132 = ssub.s32 %s14, %s21
      %p133 = scmp.eq.s32.totalorder %s132, 0
      %s135 = sadd.s32 %s134, 1
      %s136 = scalar_select %p133, %s134, %s135
      %p139 = pneg %p133
      %p140 = scmp.eq.s32.totalorder %s14, 1
      %p141 = por %p139, %p140
      %p142 = scmp.ne.s32.totalorder %s134, %s137
      %p143 = scmp.eq.s32.totalorder %s14, 0
      %p144 = por %p142, %p143
      %p145 = scmp.ne.s32.totalorder %s134, %s137
      %p146 = scmp.eq.s32.totalorder %s19, 1
      %p147 = por %p145, %p146
      %p148 = scmp.ne.s32.totalorder %s137, %s138
      %p149 = scmp.eq.s32.totalorder %s19, 0
      %p150 = por %p148, %p149
      %p151 = scmp.ne.s32.totalorder %s137, %s138
      %p152 = scmp.eq.s32.totalorder %s20, 1
      %p153 = por %p151, %p152
      %p155 = scmp.ne.s32.totalorder %s138, %s154
      %p156 = scmp.eq.s32.totalorder %s20, 0
      %p157 = por %p155, %p156
      %p158 = scmp.le.s32.totalorder 1, %s14
      %p159 = scmp.lt.s32.totalorder %s14, 3
      %p160 = pnand %p158, %p159
      %p161 = pneg %p160
      // Predicated region
      $region9: #{tpu_custom_call.1} parent=5 // pred_check
        _
      $region10: #{tpu_custom_call.1} parent=5 // pred_check_branch
        %163 = sbr.rel (%p160) target = $region12
      $region11: #{tpu_custom_call.1} parent=5 // pred_region
        %s164 = ssub.s32 %s14, 1
        // Predicated region
        $region13: #{tpu_custom_call.1} parent=11 // pred_check
          %p165 = pneg %p61
        $region14: #{tpu_custom_call.1} parent=11 // pred_check_branch
          %167 = sbr.rel (%p165) target = $region16
        $region15: #{tpu_custom_call.1} parent=11 // pred_region
          _
        $region16: #{tpu_custom_call.1} parent=11 // pred_fallthru
          _
        // Predicated region
        $region17: #{tpu_custom_call.1} parent=11 // pred_check
          %p168 = pneg %p82
        $region18: #{tpu_custom_call.1} parent=11 // pred_check_branch
          %170 = sbr.rel (%p168) target = $region20
        $region19: #{tpu_custom_call.1} parent=11 // pred_region
          _
        $region20: #{tpu_custom_call.1} parent=11 // pred_fallthru
          _
        // Predicated region
        $region21: #{tpu_custom_call.1} parent=11 // pred_check
          %p171 = pneg %p103
        $region22: #{tpu_custom_call.1} parent=11 // pred_check_branch
          %173 = sbr.rel (%p171) target = $region24
        $region23: #{tpu_custom_call.1} parent=11 // pred_region
          _
        $region24: #{tpu_custom_call.1} parent=11 // pred_fallthru
          _
        // Predicated region
        $region25: #{tpu_custom_call.1} parent=11 // pred_check
          %p174 = pneg %p124
        $region26: #{tpu_custom_call.1} parent=11 // pred_check_branch
          %176 = sbr.rel (%p174) target = $region28
        $region27: #{tpu_custom_call.1} parent=11 // pred_region
          _
        $region28: #{tpu_custom_call.1} parent=11 // pred_fallthru
          _
      $region12: #{tpu_custom_call.1} parent=5 // pred_fallthru
        _
      %p177 = scmp.lt.s32.totalorder %s14, 2
      // Predicated region
      $region29: #{tpu_custom_call.1} parent=5 // pred_check
        %p178 = pneg %p177
      $region30: #{tpu_custom_call.1} parent=5 // pred_check_branch
        %180 = sbr.rel (%p178) target = $region32
      $region31: #{tpu_custom_call.1} parent=5 // pred_region
        // Predicated region
        $region33: #{tpu_custom_call.1} parent=31 // pred_check
          %p181 = pneg %p34
        $region34: #{tpu_custom_call.1} parent=31 // pred_check_branch
          %183 = sbr.rel (%p181) target = $region36
        $region35: #{tpu_custom_call.1} parent=31 // pred_region
          %p184 = scmp.lt.s32.totalorder %s14, 1
          %s185 = scalar_select %p184, %s14, 1
          %s186 = smul.addr %s185, 4
          %s187 = scalar_lea.vmem %s0, %s186
        $region36: #{tpu_custom_call.1} parent=31 // pred_fallthru
          _
      $region32: #{tpu_custom_call.1} parent=5 // pred_fallthru
        _
      %p188 = scmp.le.s32.totalorder 1, %s14
      %p189 = scmp.lt.s32.totalorder %s14, 3
      %p190 = pnand %p188, %p189
      %p191 = pneg %p190
      // Predicated region
      $region37: #{tpu_custom_call.1} parent=5 // pred_check
        _
      $region38: #{tpu_custom_call.1} parent=5 // pred_check_branch
        %193 = sbr.rel (%p190) target = $region40
      $region39: #{tpu_custom_call.1} parent=5 // pred_region
        %s194 = ssub.s32 %s14, 1
        %p195 = scmp.lt.s32.totalorder %s19, 1
        %s196 = scalar_select %p195, %s19, 1
        %s197 = smul.addr %s196, 4
        %s198 = scalar_lea.vmem %s0, %s197
        %p199 = pneg %p40
        %p200 = pneg %p37
        %p201 = pneg %p61
        %p202 = pneg %p58
        %p203 = pneg %p82
        %p204 = pneg %p79
        %p205 = pneg %p103
        %p206 = pneg %p100
        %p207 = pneg %p124
        %p208 = pneg %p121
        %p209 = pneg %p150
        %p210 = pneg %p147
        %s211 = sand.u32 %s137, 1
        %s212 = scalar_lea.sflag [#allocation3], %s211
        %s213 = sand.u32 %s137, 1
        %s214 = smul.addr %s213, 8
        %s215 = scalar_lea.vmem [#allocation2], %s214
        %p216 = scmp.lt.s32.totalorder %s19, 1
        %s217 = scalar_select %p216, %s19, 1
        %s218 = smul.addr %s217, 4
        %s219 = scalar_lea.vmem %s0, %s218
        %v221 = vld [vmem:[%s219] sm:$0xf]
        %v222 = vld [vmem:[%s1] sm:$0xf]
        %v223 = vld [vmem:[%s1 + $0x4] sm:$0xf]
        %v224 = vld [vmem:[%s1 + $0x8] sm:$0xf]
        %v225 = vld [vmem:[%s1 + $0xc] sm:$0xf]
        %v226 = vld [vmem:[%s2] sm:$0x1]
        %v228 = vlaneseq
        %v229 = vshrl.u32 %v228, 7
        %v230 = vsub.s32 0, %v229
        %v231 = vrot.slane %v226, %v230
        %v237 = vunpack.c.l.b16 %v222
        %v238 = vunpack.c.l.b16 %v223
        %v239 = vunpack.c.l.b16 %v224
        %v240 = vunpack.c.l.b16 %v225
        %v241 = vpack.c.b16 %v238, %v237
        %v242 = vpack.c.b16 %v240, %v239
        %vm245 = vcmask 261120
        %v247 = vsel %vm245, %v221, 0
        %249 = vmatprep.subr.bf16.mxu0 0
        %250 = vmatpush1.bf16.msra.mxu0 0
        %251 = vmatprep.subr.bf16.mxu0 0
        %252 = vmatpush1.bf16.msra.mxu0 0
        %253 = vmatprep.subr.bf16.mxu0 0
        %254 = vmatpush1.bf16.msra.mxu0 0
        %255 = vmatprep.subr.bf16.mxu0 0
        %256 = vmatpush1.bf16.msra.mxu0 0
        %257 = vmatprep.subr.bf16.mxu0 0
        %258 = vmatpush1.bf16.msra.mxu0 0
        %259 = vmatprep.subr.bf16.mxu0 0
        %260 = vmatpush1.bf16.msra.mxu0 0
        %261 = vmatprep.subr.bf16.mxu0 0
        %262 = vmatpush1.bf16.msra.mxu0 %v242
        %263 = vmatprep.subr.bf16.mxu0 0
        %264 = vmatpush1.bf16.msra.mxu0 %v241
        %265 = vmatprep.subr.bf16.mxu0 0
        %266 = vmatpush2.bf16.msra.mxu0 0
        %267 = vmatprep.subr.bf16.mxu0 0
        %268 = vmatpush2.bf16.msra.mxu0 0
        %269 = vmatprep.subr.bf16.mxu0 0
        %270 = vmatpush2.bf16.msra.mxu0 0
        %271 = vmatprep.subr.bf16.mxu0 0
        %272 = vmatpush2.bf16.msra.mxu0 0
        %273 = vmatprep.subr.bf16.mxu0 0
        %274 = vmatpush2.bf16.msra.mxu0 0
        %275 = vmatprep.subr.bf16.mxu0 0
        %276 = vmatpush2.bf16.msra.mxu0 0
        %277 = vmatprep.subr.bf16.mxu0 0
        %278 = vmatpush2.bf16.msra.mxu0 0
        %279 = vmatprep.subr.bf16.mxu0 0
        %280 = vmatpush2.bf16.msra.mxu0 0
        %281 = vmatprep.mubr.bf16.mxu0 0
        %282 = vmatmul.mubr.bf16.gmra.mxu0 %v247
        %v283 = vpop.f32.mrf.mxu0
        %v284 = vadd.f32 %v231, %v283
        %v285 = vpop.f32.mrf.mxu0
        %v286 = vpop.f32.mrf.mxu0
        %v287 = vpop.f32.mrf.mxu0
        %288 = vdwg.mxu0
        %v289 = vmax.f32 %v284, 0.0
        %v290 = vpack.c.bf16 %v289, %v289
        %v291 = vld [vmem:[%s3] sm:$0xf]
        %v292 = vld [vmem:[%s3 + $0x4] sm:$0xf]
        %v293 = vld [vmem:[%s3 + $0x8] sm:$0xf]
        %v294 = vld [vmem:[%s3 + $0xc] sm:$0xf]
        %v295 = vld [vmem:[%s3 + $0x10] sm:$0xf]
        %v296 = vld [vmem:[%s3 + $0x14] sm:$0xf]
        %v297 = vld [vmem:[%s3 + $0x18] sm:$0xf]
        %v298 = vld [vmem:[%s3 + $0x1c] sm:$0xf]
        %v299 = vld [vmem:[%s3 + $0x20] sm:$0xf]
        %v300 = vld [vmem:[%s3 + $0x24] sm:$0xf]
        %v301 = vld [vmem:[%s3 + $0x28] sm:$0xf]
        %v302 = vld [vmem:[%s3 + $0x2c] sm:$0xf]
        %v303 = vld [vmem:[%s3 + $0x30] sm:$0xf]
        %v304 = vld [vmem:[%s3 + $0x34] sm:$0xf]
        %v305 = vld [vmem:[%s3 + $0x38] sm:$0xf]
        %v306 = vld [vmem:[%s3 + $0x3c] sm:$0xf]
        %v307 = vld [vmem:[%s4] sm:$0x1]
        %v309 = vlaneseq
        %v310 = vshrl.u32 %v309, 7
        %v311 = vsub.s32 0, %v310
        %v312 = vrot.slane %v307, %v311
        %v330 = vunpack.c.l.b16 %v291
        %v331 = vunpack.c.l.b16 %v292
        %v332 = vunpack.c.l.b16 %v293
        %v333 = vunpack.c.l.b16 %v294
        %v334 = vunpack.c.l.b16 %v295
        %v335 = vunpack.c.l.b16 %v296
        %v336 = vunpack.c.l.b16 %v297
        %v337 = vunpack.c.l.b16 %v298
        %v338 = vunpack.c.l.b16 %v299
        %v339 = vunpack.c.l.b16 %v300
        %v340 = vunpack.c.l.b16 %v301
        %v341 = vunpack.c.l.b16 %v302
        %v342 = vunpack.c.l.b16 %v303
        %v343 = vunpack.c.l.b16 %v304
        %v344 = vunpack.c.l.b16 %v305
        %v345 = vunpack.c.l.b16 %v306
        %v346 = vpack.c.b16 %v331, %v330
        %v347 = vpack.c.b16 %v333, %v332
        %v348 = vpack.c.b16 %v335, %v334
        %v349 = vpack.c.b16 %v337, %v336
        %v350 = vpack.c.b16 %v339, %v338
        %v351 = vpack.c.b16 %v341, %v340
        %v352 = vpack.c.b16 %v343, %v342
        %v353 = vpack.c.b16 %v345, %v344
        %362 = vmatprep.subr.bf16.mxu0 0
        %363 = vmatpush1.bf16.msra.mxu0 %v353
        %364 = vmatprep.subr.bf16.mxu0 0
        %365 = vmatpush1.bf16.msra.mxu0 %v352
        %366 = vmatprep.subr.bf16.mxu0 0
        %367 = vmatpush1.bf16.msra.mxu0 %v351
        %368 = vmatprep.subr.bf16.mxu0 0
        %369 = vmatpush1.bf16.msra.mxu0 %v350
        %370 = vmatprep.subr.bf16.mxu0 0
        %371 = vmatpush1.bf16.msra.mxu0 %v349
        %372 = vmatprep.subr.bf16.mxu0 0
        %373 = vmatpush1.bf16.msra.mxu0 %v348
        %374 = vmatprep.subr.bf16.mxu0 0
        %375 = vmatpush1.bf16.msra.mxu0 %v347
        %376 = vmatprep.subr.bf16.mxu0 0
        %377 = vmatpush1.bf16.msra.mxu0 %v346
        %378 = vmatprep.subr.bf16.mxu0 0
        %379 = vmatpush2.bf16.msra.mxu0 0
        %380 = vmatprep.subr.bf16.mxu0 0
        %381 = vmatpush2.bf16.msra.mxu0 0
        %382 = vmatprep.subr.bf16.mxu0 0
        %383 = vmatpush2.bf16.msra.mxu0 0
        %384 = vmatprep.subr.bf16.mxu0 0
        %385 = vmatpush2.bf16.msra.mxu0 0
        %386 = vmatprep.subr.bf16.mxu0 0
        %387 = vmatpush2.bf16.msra.mxu0 0
        %388 = vmatprep.subr.bf16.mxu0 0
        %389 = vmatpush2.bf16.msra.mxu0 0
        %390 = vmatprep.subr.bf16.mxu0 0
        %391 = vmatpush2.bf16.msra.mxu0 0
        %392 = vmatprep.subr.bf16.mxu0 0
        %393 = vmatpush2.bf16.msra.mxu0 0
        %394 = vmatprep.mubr.bf16.mxu0 0
        %395 = vmatmul.mubr.bf16.gmra.mxu0 %v290
        %v396 = vpop.f32.mrf.mxu0
        %v397 = vadd.f32 %v312, %v396
        %v398 = vpop.f32.mrf.mxu0
        %v399 = vpop.f32.mrf.mxu0
        %v400 = vpop.f32.mrf.mxu0
        %401 = vdwg.mxu0
        %vm402 = vcmask 130048
        %403 = vst.msk [vmem:[%s215] sm:$0xff] %vm402, %v397
        %s404 = sand.u32 %s137, 1
        %s405 = scalar_lea.sflag [#allocation3], %s404
        %s406 = sand.u32 %s137, 1
        %s407 = smul.addr %s406, 8
        %s408 = scalar_lea.vmem [#allocation2], %s407
        // Predicated region
        $region41: #{tpu_custom_call.1} parent=39 // pred_check
          %p409 = pneg %p147
        $region42: #{tpu_custom_call.1} parent=39 // pred_check_branch
          %411 = sbr.rel (%p409) target = $region44
        $region43: #{tpu_custom_call.1} parent=39 // pred_region
          %s413 = ssub.s32 128, 128
          %414 = vsyncadd %s405, %s413
          %s415 = smul.addr %s19, 128
          %s416 = scalar_lea.hbm %s5, %s415
          %s418 = sshll.u32 %s408, 4
          %s419 = int_to_ptr.vmem [resolvable:$true] %s418
          %421 = dma.vmem_to_hbm [thread:$0]  %s419, 128, %s416, %s405
        $region44: #{tpu_custom_call.1} parent=39 // pred_fallthru
          _
      $region40: #{tpu_custom_call.1} parent=5 // pred_fallthru
        _
      %p422 = scmp.le.s32.totalorder 2, %s14
      // Predicated region
      $region45: #{tpu_custom_call.1} parent=5 // pred_check
        %p423 = pneg %p422
      $region46: #{tpu_custom_call.1} parent=5 // pred_check_branch
        %425 = sbr.rel (%p423) target = $region48
      $region47: #{tpu_custom_call.1} parent=5 // pred_region
        %s426 = ssub.s32 %s14, 2
        // Predicated region
        $region49: #{tpu_custom_call.1} parent=47 // pred_check
          %p427 = pneg %p153
        $region50: #{tpu_custom_call.1} parent=47 // pred_check_branch
          %429 = sbr.rel (%p427) target = $region52
        $region51: #{tpu_custom_call.1} parent=47 // pred_region
          %s430 = sand.u32 %s138, 1
          %s431 = scalar_lea.sflag [#allocation3], %s430
          %s432 = sand.u32 %s138, 1
          %s433 = smul.addr %s432, 8
          %s434 = scalar_lea.vmem [#allocation2], %s433
          %435 = dma.done %s431, 128
        $region52: #{tpu_custom_call.1} parent=47 // pred_fallthru
          _
      $region48: #{tpu_custom_call.1} parent=5 // pred_fallthru
        _
    $region6: #{tpu_custom_call.1} parent=1 // loop_footer
      %s18 = sadd.s32 1, %s14
    $region7: #{tpu_custom_call.1} parent=1 // loop_footer_branch
      %13 = sbr.rel target = $region3
    $region8: #{tpu_custom_call.1} parent=1 // loop_exit
      _
    %436 = vsyncpa [#allocation3], 1
    %s437 = scalar_lea.sflag [#allocation3], 1
    %438 = vsyncpa %s437, 1

</llo_original>
